<compile_context>
chip_gen: v7x
topology: tpu7x:2x2x1
jax: 0.10.0
libtpu: 0.0.40
codegen_flags: <defaults>
</compile_context>

<pallas_src>
import functools
import math

import jax
import jax.numpy as jnp
from jax.experimental import pallas as pl
from jax.experimental.pallas import tpu as pltpu


def lora_kv_kernel(x_ref, wt_ref, at_ref, bt_ref, bias_ref, o_ref,
                   acc_ref, z_ref):
    """One (i, j, k) grid step of y = x @ Wb.T + (x @ A_aug.T) @ B_aug.T + b.

    x_ref    : (tm, tk)   activations tile
    wt_ref   : (tk, tn)   pre-transposed base weight tile (in_f x base_out)
    at_ref   : (tk, r2)   pre-transposed augmented LoRA A tile
    bt_ref   : (r2, tn)   pre-transposed augmented (scale-folded) LoRA B tile
    bias_ref : (1, tn)    base bias tile
    o_ref    : (tm, tn)   output tile
    acc_ref  : (tm, tn) f32 scratch — main GEMM accumulator
    z_ref    : (tm, r2) f32 scratch — low-rank (x @ A_aug.T) accumulator
    """
    k = pl.program_id(2)

    @pl.when(k == 0)
    def _():
        acc_ref[...] = jnp.zeros_like(acc_ref)
        z_ref[...] = jnp.zeros_like(z_ref)

    # Main GEMM and the tiny low-rank projection, both accumulated over K.
    acc_ref[...] += jnp.dot(x_ref[...], wt_ref[...],
                            preferred_element_type=jnp.float32)
    z_ref[...] += jnp.dot(x_ref[...], at_ref[...],
                          preferred_element_type=jnp.float32)

    @pl.when(k == pl.num_programs(2) - 1)
    def _():
        corr = jnp.dot(z_ref[...], bt_ref[...].astype(jnp.float32),
                       preferred_element_type=jnp.float32)
        y = acc_ref[...] + corr + bias_ref[...].astype(jnp.float32)
        o_ref[...] = y.astype(o_ref.dtype)


def _round_up(x, m):
    return ((x + m - 1) // m) * m


def _pad2(a, rows, cols):
    pr, pc = rows - a.shape[0], cols - a.shape[1]
    if pr == 0 and pc == 0:
        return a
    return jnp.pad(a, ((0, pr), (0, pc)))


def lora_kv_forward(x, base_w, base_b, lora_A, lora_B, scale,
                    tm_pref=256, tn_pref=512, tk_pref=512):
    """Flatten leading dims, build augmented LoRA factors, run the tiled kernel."""
    *lead, in_f = x.shape
    base_out = base_w.shape[0]
    out_f = lora_B[0].shape[0]
    rank = lora_A[0].shape[0]
    kv_off = base_out - 2 * out_f
    M = math.prod(lead) if lead else 1

    dt = base_w.dtype
    # Fold `scale` into an augmented B; zero rows for the Q block so the
    # low-rank correction is exactly cat([0, scale*Bk@Ak, scale*Bv@Av]) @ ...
    B_aug = jnp.zeros((base_out, 2 * rank), dt)
    B_aug = B_aug.at[kv_off:kv_off + out_f, :rank].set(
        (scale * lora_B[0]).astype(dt))
    B_aug = B_aug.at[kv_off + out_f:, rank:].set(
        (scale * lora_B[1]).astype(dt))
    A_aug = jnp.concatenate([lora_A[0], lora_A[1]], axis=0).astype(dt)  # (2r, in_f)

    # Pre-transpose once in HBM: MXU-natural (M,K)x(K,N), lane-dense output N.
    wT = base_w.T            # (in_f, base_out)
    aT = A_aug.T             # (in_f, 2r)
    bT = B_aug.T             # (2r, base_out)

    # Tile sizes: lane dims are 128-multiples, sublane dims 8-multiples.
    tm = min(tm_pref, _round_up(M, 8))
    tn = min(tn_pref, _round_up(base_out, 128))
    tk = min(tk_pref, _round_up(in_f, 128))
    r2 = _round_up(2 * rank, 8)

    M_pad = _round_up(M, tm)
    N_pad = _round_up(base_out, tn)
    K_pad = _round_up(in_f, tk)

    x2 = _pad2(x.reshape(M, in_f), M_pad, K_pad)
    wT_p = _pad2(wT, K_pad, N_pad)
    aT_p = _pad2(aT, K_pad, r2)
    bT_p = _pad2(bT, r2, N_pad)
    bias2 = _pad2(base_b.reshape(1, base_out), 1, N_pad)

    grid = (M_pad // tm, N_pad // tn, K_pad // tk)

    out = pl.pallas_call(
        lora_kv_kernel,
        out_shape=jax.ShapeDtypeStruct((M_pad, N_pad), x.dtype),
        grid_spec=pltpu.PrefetchScalarGridSpec(
            num_scalar_prefetch=0,
            grid=grid,
            in_specs=[
                pl.BlockSpec((tm, tk), lambda i, j, k: (i, k)),   # x
                pl.BlockSpec((tk, tn), lambda i, j, k: (k, j)),   # W.T
                pl.BlockSpec((tk, r2), lambda i, j, k: (k, 0)),   # A_aug.T
                pl.BlockSpec((r2, tn), lambda i, j, k: (0, j)),   # B_aug.T
                pl.BlockSpec((1, tn), lambda i, j, k: (0, j)),    # bias
            ],
            out_specs=pl.BlockSpec((tm, tn), lambda i, j, k: (i, j)),
            scratch_shapes=[
                pltpu.VMEM((tm, tn), jnp.float32),
                pltpu.VMEM((tm, r2), jnp.float32),
            ],
        ),
        compiler_params=pltpu.CompilerParams(
            dimension_semantics=("parallel", "parallel", "arbitrary")),
    )(x2, wT_p, aT_p, bT_p, bias2)

    return out[:M, :base_out].reshape(*lead, base_out)


def lora_kv_reference(x, base_w, base_b, lora_A, lora_B, scale):
    """Pure-JAX transcription of the PyTorch forward, for verification."""
    deltas = [scale * (B @ A) for A, B in zip(lora_A, lora_B)]
    delta_kv = jnp.concatenate(deltas, axis=0)                      # (2*out_f, in_f)
    zeros = jnp.zeros_like(base_w)[:-delta_kv.shape[0]]
    w = base_w + jnp.concatenate([zeros, delta_kv], axis=0)
    return x @ w.T + base_b


if __name__ == "__main__":
    # Small shapes consistent with the module: a fused-QKV base linear.
    batch, seq = 2, 8
    in_features = 32
    out_features = 32                 # per-head-group (K or V) output size
    base_out = 3 * out_features       # base module projects to Q,K,V -> 96
    rank = 4
    scale = 0.5

    key = jax.random.PRNGKey(0)
    k_x, k_w, k_b, k_a0, k_a1, k_b0, k_b1 = jax.random.split(key, 7)

    x = jax.random.normal(k_x, (batch, seq, in_features), jnp.float32)
    base_w = jax.random.normal(k_w, (base_out, in_features), jnp.float32) * 0.1
    base_b = jax.random.normal(k_b, (base_out,), jnp.float32) * 0.1

    # Module init: lora_A ~ kaiming_uniform(a=sqrt(rank)), lora_B = zeros.
    # lora_B gets small deterministic random values instead of zeros so the
    # LoRA path of the kernel is actually exercised by the check.
    a_gain = math.sqrt(2.0 / (1.0 + rank))            # kaiming gain with a=sqrt(rank)
    a_bound = a_gain * math.sqrt(3.0 / in_features)
    lora_A = [
        jax.random.uniform(k_a0, (rank, in_features), jnp.float32, -a_bound, a_bound),
        jax.random.uniform(k_a1, (rank, in_features), jnp.float32, -a_bound, a_bound),
    ]
    lora_B = [
        jax.random.normal(k_b0, (out_features, rank), jnp.float32) * 0.05,
        jax.random.normal(k_b1, (out_features, rank), jnp.float32) * 0.05,
    ]

    out = lora_kv_forward(x, base_w, base_b, lora_A, lora_B, scale)
    out = jax.block_until_ready(out)

    ref = lora_kv_reference(x, base_w, base_b, lora_A, lora_B, scale)
    assert out.shape == (batch, seq, base_out), out.shape
    assert jnp.allclose(out, ref, atol=1e-4, rtol=1e-4), "mismatch vs reference"

    print("KERNEL_OK")
</pallas_src>

<mosaic_0001>
module attributes {stable_mosaic.version = 11 : i64} {
  func.func @lora_kv_kernel(%arg0: i32, %arg1: i32, %arg2: i32, %arg3: memref<16x128xf32, #tpu.memory_space<vmem>>, %arg4: memref<128x128xf32, #tpu.memory_space<vmem>>, %arg5: memref<128x8xf32, #tpu.memory_space<vmem>>, %arg6: memref<8x128xf32, #tpu.memory_space<vmem>>, %arg7: memref<1x128xf32, #tpu.memory_space<vmem>>, %arg8: memref<16x128xf32, #tpu.memory_space<vmem>>, %arg9: memref<16x128xf32, #tpu.memory_space<vmem>>, %arg10: memref<16x8xf32, #tpu.memory_space<vmem>>) attributes {dimension_semantics = [#tpu.dimension_semantics<parallel>, #tpu.dimension_semantics<parallel>, #tpu.dimension_semantics<arbitrary>], iteration_bounds = array<i64: 1, 1, 1>, scalar_prefetch = 0 : i64, scratch_operands = 2 : i64, tpu.core_type = #tpu.core_type<tc>, window_params = [{transform_indices = @transform_0, window_bounds = array<i64: 16, 128>}, {transform_indices = @transform_1, window_bounds = array<i64: 128, 128>}, {transform_indices = @transform_2, window_bounds = array<i64: 128, 8>}, {transform_indices = @transform_3, window_bounds = array<i64: 8, 128>}, {transform_indices = @transform_4, window_bounds = array<i64: 1, 128>}, {transform_indices = @transform_5, window_bounds = array<i64: 16, 128>}]} {
    %c0_i32 = arith.constant 0 : i32
    %0 = arith.cmpi eq, %arg2, %c0_i32 : i32
    %1 = arith.extui %0 : i1 to i32
    %c0_i32_0 = arith.constant 0 : i32
    %2 = arith.cmpi ne, %1, %c0_i32_0 : i32
    scf.if %2 {
      %cst_19 = arith.constant 0.000000e+00 : f32
      %18 = vector.broadcast %cst_19 : f32 to vector<16x128xf32>
      %c0_20 = arith.constant 0 : index
      %c0_21 = arith.constant 0 : index
      %19 = vector.load %arg9[%c0_20, %c0_21] : memref<16x128xf32, #tpu.memory_space<vmem>>, vector<16x128xf32>
      tpu.vector_store %arg9[%c0_20, %c0_21], %18 {strides = array<i32>} : memref<16x128xf32, #tpu.memory_space<vmem>>, vector<16x128xf32>,
      %cst_22 = arith.constant 0.000000e+00 : f32
      %20 = vector.broadcast %cst_22 : f32 to vector<16x8xf32>
      %c0_23 = arith.constant 0 : index
      %c0_24 = arith.constant 0 : index
      %21 = vector.load %arg10[%c0_23, %c0_24] : memref<16x8xf32, #tpu.memory_space<vmem>>, vector<16x8xf32>
      tpu.vector_store %arg10[%c0_23, %c0_24], %20 {strides = array<i32>} : memref<16x8xf32, #tpu.memory_space<vmem>>, vector<16x8xf32>,
    } else {
    }
    %c0 = arith.constant 0 : index
    %c0_1 = arith.constant 0 : index
    %3 = vector.load %arg9[%c0, %c0_1] : memref<16x128xf32, #tpu.memory_space<vmem>>, vector<16x128xf32>
    %c0_2 = arith.constant 0 : index
    %c0_3 = arith.constant 0 : index
    %4 = vector.load %arg3[%c0_2, %c0_3] : memref<16x128xf32, #tpu.memory_space<vmem>>, vector<16x128xf32>
    %c0_4 = arith.constant 0 : index
    %c0_5 = arith.constant 0 : index
    %5 = vector.load %arg4[%c0_4, %c0_5] : memref<128x128xf32, #tpu.memory_space<vmem>>, vector<128x128xf32>
    %cst = arith.constant dense<0.000000e+00> : vector<16x128xf32>
    %6 = tpu.matmul %4, %5, %cst {dimension_numbers = #tpu.dot_dimension_numbers<[1], [0], [0], [1], [0, 0, 1, 1], [], []>} : vector<16x128xf32>, vector<128x128xf32>, vector<16x128xf32> -> vector<16x128xf32>
    %7 = arith.addf %3, %6 : vector<16x128xf32>
    %c0_6 = arith.constant 0 : index
    %c0_7 = arith.constant 0 : index
    %8 = vector.load %arg9[%c0_6, %c0_7] : memref<16x128xf32, #tpu.memory_space<vmem>>, vector<16x128xf32>
    tpu.vector_store %arg9[%c0_6, %c0_7], %7 {strides = array<i32>} : memref<16x128xf32, #tpu.memory_space<vmem>>, vector<16x128xf32>,
    %c0_8 = arith.constant 0 : index
    %c0_9 = arith.constant 0 : index
    %9 = vector.load %arg10[%c0_8, %c0_9] : memref<16x8xf32, #tpu.memory_space<vmem>>, vector<16x8xf32>
    %c0_10 = arith.constant 0 : index
    %c0_11 = arith.constant 0 : index
    %10 = vector.load %arg3[%c0_10, %c0_11] : memref<16x128xf32, #tpu.memory_space<vmem>>, vector<16x128xf32>
    %c0_12 = arith.constant 0 : index
    %c0_13 = arith.constant 0 : index
    %11 = vector.load %arg5[%c0_12, %c0_13] : memref<128x8xf32, #tpu.memory_space<vmem>>, vector<128x8xf32>
    %cst_14 = arith.constant dense<0.000000e+00> : vector<16x8xf32>
    %12 = tpu.matmul %10, %11, %cst_14 {dimension_numbers = #tpu.dot_dimension_numbers<[1], [0], [0], [1], [0, 0, 1, 1], [], []>} : vector<16x128xf32>, vector<128x8xf32>, vector<16x8xf32> -> vector<16x8xf32>
    %13 = arith.addf %9, %12 : vector<16x8xf32>
    %c0_15 = arith.constant 0 : index
    %c0_16 = arith.constant 0 : index
    %14 = vector.load %arg10[%c0_15, %c0_16] : memref<16x8xf32, #tpu.memory_space<vmem>>, vector<16x8xf32>
    tpu.vector_store %arg10[%c0_15, %c0_16], %13 {strides = array<i32>} : memref<16x8xf32, #tpu.memory_space<vmem>>, vector<16x8xf32>,
    %c0_i32_17 = arith.constant 0 : i32
    %15 = arith.cmpi eq, %arg2, %c0_i32_17 : i32
    %16 = arith.extui %15 : i1 to i32
    %c0_i32_18 = arith.constant 0 : i32
    %17 = arith.cmpi ne, %16, %c0_i32_18 : i32
    scf.if %17 {
      %c0_19 = arith.constant 0 : index
      %c0_20 = arith.constant 0 : index
      %18 = vector.load %arg10[%c0_19, %c0_20] : memref<16x8xf32, #tpu.memory_space<vmem>>, vector<16x8xf32>
      %c0_21 = arith.constant 0 : index
      %c0_22 = arith.constant 0 : index
      %19 = vector.load %arg6[%c0_21, %c0_22] : memref<8x128xf32, #tpu.memory_space<vmem>>, vector<8x128xf32>
      %cst_23 = arith.constant dense<0.000000e+00> : vector<16x128xf32>
      %20 = tpu.matmul %18, %19, %cst_23 {dimension_numbers = #tpu.dot_dimension_numbers<[1], [0], [0], [1], [0, 0, 1, 1], [], []>} : vector<16x8xf32>, vector<8x128xf32>, vector<16x128xf32> -> vector<16x128xf32>
      %c0_24 = arith.constant 0 : index
      %c0_25 = arith.constant 0 : index
      %21 = vector.load %arg9[%c0_24, %c0_25] : memref<16x128xf32, #tpu.memory_space<vmem>>, vector<16x128xf32>
      %22 = arith.addf %21, %20 : vector<16x128xf32>
      %c0_26 = arith.constant 0 : index
      %c0_27 = arith.constant 0 : index
      %23 = vector.load %arg7[%c0_26, %c0_27] : memref<1x128xf32, #tpu.memory_space<vmem>>, vector<1x128xf32>
      %24 = vector.broadcast %23 : vector<1x128xf32> to vector<16x128xf32>
      %25 = arith.addf %22, %24 : vector<16x128xf32>
      %c0_28 = arith.constant 0 : index
      %c0_29 = arith.constant 0 : index
      %26 = vector.load %arg8[%c0_28, %c0_29] : memref<16x128xf32, #tpu.memory_space<vmem>>, vector<16x128xf32>
      tpu.vector_store %arg8[%c0_28, %c0_29], %25 {strides = array<i32>} : memref<16x128xf32, #tpu.memory_space<vmem>>, vector<16x128xf32>,
    } else {
    }
    return
  }
  func.func @transform_0(%arg0: i32, %arg1: i32, %arg2: i32) -> (i32, i32) {
    %c0_i32 = arith.constant 0 : i32
    return %arg0, %arg2 : i32, i32
  }
  func.func @transform_1(%arg0: i32, %arg1: i32, %arg2: i32) -> (i32, i32) {
    %c0_i32 = arith.constant 0 : i32
    return %arg2, %arg1 : i32, i32
  }
  func.func @transform_2(%arg0: i32, %arg1: i32, %arg2: i32) -> (i32, i32) {
    %c0_i32 = arith.constant 0 : i32
    %c0_i32_0 = arith.constant 0 : i32
    return %arg2, %c0_i32 : i32, i32
  }
  func.func @transform_3(%arg0: i32, %arg1: i32, %arg2: i32) -> (i32, i32) {
    %c0_i32 = arith.constant 0 : i32
    %c0_i32_0 = arith.constant 0 : i32
    return %c0_i32, %arg1 : i32, i32
  }
  func.func @transform_4(%arg0: i32, %arg1: i32, %arg2: i32) -> (i32, i32) {
    %c0_i32 = arith.constant 0 : i32
    %c0_i32_0 = arith.constant 0 : i32
    return %c0_i32, %arg1 : i32, i32
  }
  func.func @transform_5(%arg0: i32, %arg1: i32, %arg2: i32) -> (i32, i32) {
    %c0_i32 = arith.constant 0 : i32
    return %arg0, %arg1 : i32, i32
  }
}

</mosaic_0001>

<llo_original>
// kernel: tpu_custom_call.1
$region0: #{tpu_custom_call.1}
  #allocation0 [shape = 'u32[]', space=smem, size = 0x4, offset = 0x4, fixed_abs, tag = 'smem constant byte address 0x4 - core index']
  #allocation1 [shape = 'u32[144,128]{1,0:T(1,128)}', space=vmem, size = 0x12000, scoped, tag = 'internal scratch']
  #allocation2 [shape = 'f32[16,128]{1,0:T(8,128)}', space=vmem, size = 0x2000, scoped, tag = 'scratch operand']
  #allocation3 [shape = 'f32[16,8]{1,0:T(8,128)}', space=vmem, size = 0x2000, scoped, tag = 'scratch operand']
  %s0 = inlined_call_operand.hbm [shape: f32[16,128], index: 0, kind: input, shape index: {}]
  %s1 = inlined_call_operand.vmem [shape: f32[128,128], index: 1, kind: input, shape index: {}]
  %s2 = inlined_call_operand.vmem [shape: f32[128,8], index: 2, kind: input, shape index: {}]
  %s3 = inlined_call_operand.vmem [shape: f32[8,128], index: 3, kind: input, shape index: {}]
  %s4 = inlined_call_operand.vmem [shape: f32[1,128], index: 4, kind: input, shape index: {}]
  %s5 = inlined_call_operand.hbm [shape: f32[16,128], index: 5, kind: output, shape index: {}]
  %s6 = sld [smem:[#allocation0]]
  $region42: #{tpu_custom_call.1} parent=0
    _
  %s8 = ssub.s32 1, %s6
  %s9 = scalar_select 0, %s8, %s6
  $region1: #{tpu_custom_call.1} parent=0
    #allocation4 [shape = 'u8[8192]{0}', space=vmem, size = 0x2000, scoped, tag = 'input window, operand 0, single buffered']
    #allocation5 [shape = 's32[1]{0}', space=sflag, size = 0x4, scoped, tag = 'scoped memory for tpu_custom_call.1']
    #allocation6 [shape = 's32[1]{0}', space=sflag, size = 0x4, scoped, tag = 'scoped memory for tpu_custom_call.1']
    #allocation7 [shape = 'u8[8192]{0}', space=vmem, size = 0x2000, scoped, tag = 'output window, operand 0, single buffered']
    %10 = vsyncpa [#allocation5], 0
    %11 = vsyncpa [#allocation6], 0
    // Predicated region
    $region2: #{tpu_custom_call.1} parent=1 // pred_check
      _
    $region3: #{tpu_custom_call.1} parent=1 // pred_check_branch
      %13 = sbr.rel (0) target = $region5
    $region4: #{tpu_custom_call.1} parent=1 // pred_region
      %s15 = ssub.s32 256, 256
      %16 = vsyncadd [#allocation5], %s15
      %s17 = sshll.u32 [#allocation4], 4
      %s18 = int_to_ptr.vmem [resolvable:$true] %s17
      %23 = dma.hbm_to_vmem [thread:$0]  %s0, 256, %s18, [#allocation5], 128, 128, 8
    $region5: #{tpu_custom_call.1} parent=1 // pred_fallthru
      _
    // Predicated region
    $region6: #{tpu_custom_call.1} parent=1 // pred_check
      _
    $region7: #{tpu_custom_call.1} parent=1 // pred_check_branch
      %25 = sbr.rel (0) target = $region9
    $region8: #{tpu_custom_call.1} parent=1 // pred_region
      _
    $region9: #{tpu_custom_call.1} parent=1 // pred_fallthru
      _
    // Predicated region
    $region10: #{tpu_custom_call.1} parent=1 // pred_check
      _
    $region11: #{tpu_custom_call.1} parent=1 // pred_check_branch
      %27 = sbr.rel (0) target = $region13
    $region12: #{tpu_custom_call.1} parent=1 // pred_region
      _
    $region13: #{tpu_custom_call.1} parent=1 // pred_fallthru
      _
    // Predicated region
    $region14: #{tpu_custom_call.1} parent=1 // pred_check
      _
    $region15: #{tpu_custom_call.1} parent=1 // pred_check_branch
      %29 = sbr.rel (0) target = $region17
    $region16: #{tpu_custom_call.1} parent=1 // pred_region
      _
    $region17: #{tpu_custom_call.1} parent=1 // pred_fallthru
      _
    // Predicated region
    $region18: #{tpu_custom_call.1} parent=1 // pred_check
      _
    $region19: #{tpu_custom_call.1} parent=1 // pred_check_branch
      %31 = sbr.rel (0) target = $region21
    $region20: #{tpu_custom_call.1} parent=1 // pred_region
      _
    $region21: #{tpu_custom_call.1} parent=1 // pred_fallthru
      _
    // Predicated region
    $region22: #{tpu_custom_call.1} parent=1 // pred_check
      _
    $region23: #{tpu_custom_call.1} parent=1 // pred_check_branch
      %33 = sbr.rel (0) target = $region25
    $region24: #{tpu_custom_call.1} parent=1 // pred_region
      %34 = dma.done [#allocation5], 256
    $region25: #{tpu_custom_call.1} parent=1 // pred_fallthru
      _
    %p35 = scmp.eq.s32.totalorder 0, 0
    // Predicated region
    $region26: #{tpu_custom_call.1} parent=1 // pred_check
      %p36 = pneg %p35
    $region27: #{tpu_custom_call.1} parent=1 // pred_check_branch
      %38 = sbr.rel (%p36) target = $region29
    $region28: #{tpu_custom_call.1} parent=1 // pred_region
      %39 = vst [vmem:[#allocation2] sm:$0xff] 0.0
      %40 = vst [vmem:[#allocation2 + $0x8] sm:$0xff] 0.0
      %vm41 = vcmask 64512
      %42 = vst.msk [vmem:[#allocation3] sm:$0xff] %vm41, 0.0
      %43 = vst.msk [vmem:[#allocation3 + $0x8] sm:$0xff] %vm41, 0.0
    $region29: #{tpu_custom_call.1} parent=1 // pred_fallthru
      _
    %v44 = vld [vmem:[#allocation2] sm:$0xff]
    %v45 = vld [vmem:[#allocation2 + $0x8] sm:$0xff]
    %v46 = vld [vmem:[#allocation4] sm:$0xff]
    %v47 = vld [vmem:[#allocation4 + $0x8] sm:$0xff]
    %v48 = vld [vmem:[%s1] sm:$0xff]
    %v49 = vld [vmem:[%s1 + $0x8] sm:$0xff]
    %v50 = vld [vmem:[%s1 + $0x10] sm:$0xff]
    %v51 = vld [vmem:[%s1 + $0x18] sm:$0xff]
    %v52 = vld [vmem:[%s1 + $0x20] sm:$0xff]
    %v53 = vld [vmem:[%s1 + $0x28] sm:$0xff]
    %v54 = vld [vmem:[%s1 + $0x30] sm:$0xff]
    %v55 = vld [vmem:[%s1 + $0x38] sm:$0xff]
    %v56 = vld [vmem:[%s1 + $0x40] sm:$0xff]
    %v57 = vld [vmem:[%s1 + $0x48] sm:$0xff]
    %v58 = vld [vmem:[%s1 + $0x50] sm:$0xff]
    %v59 = vld [vmem:[%s1 + $0x58] sm:$0xff]
    %v60 = vld [vmem:[%s1 + $0x60] sm:$0xff]
    %v61 = vld [vmem:[%s1 + $0x68] sm:$0xff]
    %v62 = vld [vmem:[%s1 + $0x70] sm:$0xff]
    %v63 = vld [vmem:[%s1 + $0x78] sm:$0xff]
    %64 = vmatprep.subr.mxu0 0.0
    %65 = vmatpush1.msra.mxu0 %v48
    %66 = vmatprep.subr.mxu0 0.0
    %67 = vmatpush1.msra.mxu0 %v49
    %68 = vmatprep.subr.mxu0 0.0
    %69 = vmatpush1.msra.mxu0 %v50
    %70 = vmatprep.subr.mxu0 0.0
    %71 = vmatpush1.msra.mxu0 %v51
    %72 = vmatprep.subr.mxu0 0.0
    %73 = vmatpush1.msra.mxu0 %v52
    %74 = vmatprep.subr.mxu0 0.0
    %75 = vmatpush1.msra.mxu0 %v53
    %76 = vmatprep.subr.mxu0 0.0
    %77 = vmatpush1.msra.mxu0 %v54
    %78 = vmatprep.subr.mxu0 0.0
    %79 = vmatpush1.msra.mxu0 %v55
    %80 = vmatprep.subr.mxu0 0.0
    %81 = vmatpush1.msra.mxu0 %v56
    %82 = vmatprep.subr.mxu0 0.0
    %83 = vmatpush1.msra.mxu0 %v57
    %84 = vmatprep.subr.mxu0 0.0
    %85 = vmatpush1.msra.mxu0 %v58
    %86 = vmatprep.subr.mxu0 0.0
    %87 = vmatpush1.msra.mxu0 %v59
    %88 = vmatprep.subr.mxu0 0.0
    %89 = vmatpush1.msra.mxu0 %v60
    %90 = vmatprep.subr.mxu0 0.0
    %91 = vmatpush1.msra.mxu0 %v61
    %92 = vmatprep.subr.mxu0 0.0
    %93 = vmatpush1.msra.mxu0 %v62
    %94 = vmatprep.subr.mxu0 0.0
    %95 = vmatpush1.msra.mxu0 %v63
    %96 = vmatprep.subr.mxu0 0.0
    %97 = vmatpush1.msra.mxu0 0.0
    %98 = vmatprep.subr.mxu0 0.0
    %99 = vmatpush1.msra.mxu0 0.0
    %100 = vmatprep.subr.mxu0 0.0
    %101 = vmatpush1.msra.mxu0 0.0
    %102 = vmatprep.subr.mxu0 0.0
    %103 = vmatpush1.msra.mxu0 0.0
    %104 = vmatprep.subr.mxu0 0.0
    %105 = vmatpush1.msra.mxu0 0.0
    %106 = vmatprep.subr.mxu0 0.0
    %107 = vmatpush1.msra.mxu0 0.0
    %108 = vmatprep.subr.mxu0 0.0
    %109 = vmatpush1.msra.mxu0 0.0
    %110 = vmatprep.subr.mxu0 0.0
    %111 = vmatpush1.msra.mxu0 0.0
    %112 = vmatprep.subr.mxu0 0.0
    %113 = vmatpush1.msra.mxu0 0.0
    %114 = vmatprep.subr.mxu0 0.0
    %115 = vmatpush1.msra.mxu0 0.0
    %116 = vmatprep.subr.mxu0 0.0
    %117 = vmatpush1.msra.mxu0 0.0
    %118 = vmatprep.subr.mxu0 0.0
    %119 = vmatpush1.msra.mxu0 0.0
    %120 = vmatprep.subr.mxu0 0.0
    %121 = vmatpush1.msra.mxu0 0.0
    %122 = vmatprep.subr.mxu0 0.0
    %123 = vmatpush1.msra.mxu0 0.0
    %124 = vmatprep.subr.mxu0 0.0
    %125 = vmatpush1.msra.mxu0 0.0
    %126 = vmatprep.subr.mxu0 0.0
    %127 = vmatpush1.msra.mxu0 0.0
    %128 = vmatprep.mubr.f32.mxu0 0.0
    %129 = vmatmul.mubr.f32.gmra.mrb[0].mxu0 %v46
    %v130 = vpop.f32.mrb[0].mxu0
    %v131 = vadd.f32 0.0, %v130
    %v132 = vpop.f32.mrb[0].mxu0
    %133 = vmatprep.mubr.f32.mxu0 0.0
    %134 = vmatmul.mubr.f32.gmra.mrb[0].mxu0 %v47
    %v135 = vpop.f32.mrb[0].mxu0
    %v136 = vadd.f32 0.0, %v135
    %v137 = vpop.f32.mrb[0].mxu0
    %138 = vdwg.mxu0
    %v139 = vadd.f32 %v44, %v131
    %v140 = vadd.f32 %v45, %v136
    %141 = vst [vmem:[#allocation2] sm:$0xff] %v139
    %142 = vst [vmem:[#allocation2 + $0x8] sm:$0xff] %v140
    %v143 = vld [vmem:[#allocation3] sm:$0xff]
    %v144 = vld [vmem:[#allocation3 + $0x8] sm:$0xff]
    %v145 = vld [vmem:[#allocation4] sm:$0xff]
    %v146 = vld [vmem:[#allocation4 + $0x8] sm:$0xff]
    %v147 = vld [vmem:[%s2] sm:$0xff]
    %v148 = vld [vmem:[%s2 + $0x8] sm:$0xff]
    %v149 = vld [vmem:[%s2 + $0x10] sm:$0xff]
    %v150 = vld [vmem:[%s2 + $0x18] sm:$0xff]
    %v151 = vld [vmem:[%s2 + $0x20] sm:$0xff]
    %v152 = vld [vmem:[%s2 + $0x28] sm:$0xff]
    %v153 = vld [vmem:[%s2 + $0x30] sm:$0xff]
    %v154 = vld [vmem:[%s2 + $0x38] sm:$0xff]
    %v155 = vld [vmem:[%s2 + $0x40] sm:$0xff]
    %v156 = vld [vmem:[%s2 + $0x48] sm:$0xff]
    %v157 = vld [vmem:[%s2 + $0x50] sm:$0xff]
    %v158 = vld [vmem:[%s2 + $0x58] sm:$0xff]
    %v159 = vld [vmem:[%s2 + $0x60] sm:$0xff]
    %v160 = vld [vmem:[%s2 + $0x68] sm:$0xff]
    %v161 = vld [vmem:[%s2 + $0x70] sm:$0xff]
    %v162 = vld [vmem:[%s2 + $0x78] sm:$0xff]
    %163 = vmatprep.subr.mxu0 0.0
    %164 = vmatpush1.msra.mxu0 %v147
    %165 = vmatprep.subr.mxu0 0.0
    %166 = vmatpush1.msra.mxu0 %v148
    %167 = vmatprep.subr.mxu0 0.0
    %168 = vmatpush1.msra.mxu0 %v149
    %169 = vmatprep.subr.mxu0 0.0
    %170 = vmatpush1.msra.mxu0 %v150
    %171 = vmatprep.subr.mxu0 0.0
    %172 = vmatpush1.msra.mxu0 %v151
    %173 = vmatprep.subr.mxu0 0.0
    %174 = vmatpush1.msra.mxu0 %v152
    %175 = vmatprep.subr.mxu0 0.0
    %176 = vmatpush1.msra.mxu0 %v153
    %177 = vmatprep.subr.mxu0 0.0
    %178 = vmatpush1.msra.mxu0 %v154
    %179 = vmatprep.subr.mxu0 0.0
    %180 = vmatpush1.msra.mxu0 %v155
    %181 = vmatprep.subr.mxu0 0.0
    %182 = vmatpush1.msra.mxu0 %v156
    %183 = vmatprep.subr.mxu0 0.0
    %184 = vmatpush1.msra.mxu0 %v157
    %185 = vmatprep.subr.mxu0 0.0
    %186 = vmatpush1.msra.mxu0 %v158
    %187 = vmatprep.subr.mxu0 0.0
    %188 = vmatpush1.msra.mxu0 %v159
    %189 = vmatprep.subr.mxu0 0.0
    %190 = vmatpush1.msra.mxu0 %v160
    %191 = vmatprep.subr.mxu0 0.0
    %192 = vmatpush1.msra.mxu0 %v161
    %193 = vmatprep.subr.mxu0 0.0
    %194 = vmatpush1.msra.mxu0 %v162
    %195 = vmatprep.subr.mxu0 0.0
    %196 = vmatpush1.msra.mxu0 0.0
    %197 = vmatprep.subr.mxu0 0.0
    %198 = vmatpush1.msra.mxu0 0.0
    %199 = vmatprep.subr.mxu0 0.0
    %200 = vmatpush1.msra.mxu0 0.0
    %201 = vmatprep.subr.mxu0 0.0
    %202 = vmatpush1.msra.mxu0 0.0
    %203 = vmatprep.subr.mxu0 0.0
    %204 = vmatpush1.msra.mxu0 0.0
    %205 = vmatprep.subr.mxu0 0.0
    %206 = vmatpush1.msra.mxu0 0.0
    %207 = vmatprep.subr.mxu0 0.0
    %208 = vmatpush1.msra.mxu0 0.0
    %209 = vmatprep.subr.mxu0 0.0
    %210 = vmatpush1.msra.mxu0 0.0
    %211 = vmatprep.subr.mxu0 0.0
    %212 = vmatpush1.msra.mxu0 0.0
    %213 = vmatprep.subr.mxu0 0.0
    %214 = vmatpush1.msra.mxu0 0.0
    %215 = vmatprep.subr.mxu0 0.0
    %216 = vmatpush1.msra.mxu0 0.0
    %217 = vmatprep.subr.mxu0 0.0
    %218 = vmatpush1.msra.mxu0 0.0
    %219 = vmatprep.subr.mxu0 0.0
    %220 = vmatpush1.msra.mxu0 0.0
    %221 = vmatprep.subr.mxu0 0.0
    %222 = vmatpush1.msra.mxu0 0.0
    %223 = vmatprep.subr.mxu0 0.0
    %224 = vmatpush1.msra.mxu0 0.0
    %225 = vmatprep.subr.mxu0 0.0
    %226 = vmatpush1.msra.mxu0 0.0
    %227 = vmatprep.mubr.f32.mxu0 0.0
    %228 = vmatmul.mubr.f32.gmra.mrb[0].mxu0 %v145
    %v229 = vpop.f32.mrb[0].mxu0
    %v230 = vadd.f32 0.0, %v229
    %v231 = vpop.f32.mrb[0].mxu0
    %232 = vmatprep.mubr.f32.mxu0 0.0
    %233 = vmatmul.mubr.f32.gmra.mrb[0].mxu0 %v146
    %v234 = vpop.f32.mrb[0].mxu0
    %v235 = vadd.f32 0.0, %v234
    %v236 = vpop.f32.mrb[0].mxu0
    %237 = vdwg.mxu0
    %v238 = vadd.f32 %v143, %v230
    %v239 = vadd.f32 %v144, %v235
    %vm240 = vcmask 64512
    %241 = vst.msk [vmem:[#allocation3] sm:$0xff] %vm240, %v238
    %242 = vst.msk [vmem:[#allocation3 + $0x8] sm:$0xff] %vm240, %v239
    // Predicated region
    $region30: #{tpu_custom_call.1} parent=1 // pred_check
      %p243 = pneg %p35
    $region31: #{tpu_custom_call.1} parent=1 // pred_check_branch
      %245 = sbr.rel (%p243) target = $region33
    $region32: #{tpu_custom_call.1} parent=1 // pred_region
      %v246 = vld [vmem:[#allocation3] sm:$0xff]
      %v247 = vld [vmem:[#allocation3 + $0x8] sm:$0xff]
      %v248 = vld [vmem:[%s3] sm:$0xff]
      %v250 = vsel %vm240, %v246, 0
      %v253 = vsel %vm240, %v247, 0
      %255 = vmatprep.subr.mxu0 0.0
      %256 = vmatpush1.msra.mxu0 %v248
      %257 = vmatprep.subr.mxu0 0.0
      %258 = vmatpush1.msra.mxu0 0.0
      %259 = vmatprep.subr.mxu0 0.0
      %260 = vmatpush1.msra.mxu0 0.0
      %261 = vmatprep.subr.mxu0 0.0
      %262 = vmatpush1.msra.mxu0 0.0
      %263 = vmatprep.subr.mxu0 0.0
      %264 = vmatpush1.msra.mxu0 0.0
      %265 = vmatprep.subr.mxu0 0.0
      %266 = vmatpush1.msra.mxu0 0.0
      %267 = vmatprep.subr.mxu0 0.0
      %268 = vmatpush1.msra.mxu0 0.0
      %269 = vmatprep.subr.mxu0 0.0
      %270 = vmatpush1.msra.mxu0 0.0
      %271 = vmatprep.subr.mxu0 0.0
      %272 = vmatpush1.msra.mxu0 0.0
      %273 = vmatprep.subr.mxu0 0.0
      %274 = vmatpush1.msra.mxu0 0.0
      %275 = vmatprep.subr.mxu0 0.0
      %276 = vmatpush1.msra.mxu0 0.0
      %277 = vmatprep.subr.mxu0 0.0
      %278 = vmatpush1.msra.mxu0 0.0
      %279 = vmatprep.subr.mxu0 0.0
      %280 = vmatpush1.msra.mxu0 0.0
      %281 = vmatprep.subr.mxu0 0.0
      %282 = vmatpush1.msra.mxu0 0.0
      %283 = vmatprep.subr.mxu0 0.0
      %284 = vmatpush1.msra.mxu0 0.0
      %285 = vmatprep.subr.mxu0 0.0
      %286 = vmatpush1.msra.mxu0 0.0
      %287 = vmatprep.subr.mxu0 0.0
      %288 = vmatpush1.msra.mxu0 0.0
      %289 = vmatprep.subr.mxu0 0.0
      %290 = vmatpush1.msra.mxu0 0.0
      %291 = vmatprep.subr.mxu0 0.0
      %292 = vmatpush1.msra.mxu0 0.0
      %293 = vmatprep.subr.mxu0 0.0
      %294 = vmatpush1.msra.mxu0 0.0
      %295 = vmatprep.subr.mxu0 0.0
      %296 = vmatpush1.msra.mxu0 0.0
      %297 = vmatprep.subr.mxu0 0.0
      %298 = vmatpush1.msra.mxu0 0.0
      %299 = vmatprep.subr.mxu0 0.0
      %300 = vmatpush1.msra.mxu0 0.0
      %301 = vmatprep.subr.mxu0 0.0
      %302 = vmatpush1.msra.mxu0 0.0
      %303 = vmatprep.subr.mxu0 0.0
      %304 = vmatpush1.msra.mxu0 0.0
      %305 = vmatprep.subr.mxu0 0.0
      %306 = vmatpush1.msra.mxu0 0.0
      %307 = vmatprep.subr.mxu0 0.0
      %308 = vmatpush1.msra.mxu0 0.0
      %309 = vmatprep.subr.mxu0 0.0
      %310 = vmatpush1.msra.mxu0 0.0
      %311 = vmatprep.subr.mxu0 0.0
      %312 = vmatpush1.msra.mxu0 0.0
      %313 = vmatprep.subr.mxu0 0.0
      %314 = vmatpush1.msra.mxu0 0.0
      %315 = vmatprep.subr.mxu0 0.0
      %316 = vmatpush1.msra.mxu0 0.0
      %317 = vmatprep.subr.mxu0 0.0
      %318 = vmatpush1.msra.mxu0 0.0
      %319 = vmatprep.mubr.f32.mxu0 0.0
      %320 = vmatmul.mubr.f32.gmra.mrb[0].mxu0 %v250
      %v321 = vpop.f32.mrb[0].mxu0
      %v322 = vadd.f32 0.0, %v321
      %v323 = vpop.f32.mrb[0].mxu0
      %324 = vmatprep.mubr.f32.mxu0 0.0
      %325 = vmatmul.mubr.f32.gmra.mrb[0].mxu0 %v253
      %v326 = vpop.f32.mrb[0].mxu0
      %v327 = vadd.f32 0.0, %v326
      %v328 = vpop.f32.mrb[0].mxu0
      %329 = vdwg.mxu0
      %v330 = vld [vmem:[#allocation2] sm:$0xff]
      %v331 = vld [vmem:[#allocation2 + $0x8] sm:$0xff]
      %v332 = vadd.f32 %v330, %v322
      %v333 = vadd.f32 %v331, %v327
      %v334 = vld [vmem:[%s4] sm:$0x1]
      %v336 = vlaneseq
      %v337 = vshrl.u32 %v336, 7
      %v338 = vsub.s32 0, %v337
      %v339 = vrot.slane %v334, %v338
      %v341 = vadd.f32 %v332, %v339
      %v342 = vadd.f32 %v333, %v339
      %343 = vst [vmem:[#allocation7] sm:$0xff] %v341
      %344 = vst [vmem:[#allocation7 + $0x8] sm:$0xff] %v342
    $region33: #{tpu_custom_call.1} parent=1 // pred_fallthru
      _
    // Predicated region
    $region34: #{tpu_custom_call.1} parent=1 // pred_check
      _
    $region35: #{tpu_custom_call.1} parent=1 // pred_check_branch
      %346 = sbr.rel (0) target = $region37
    $region36: #{tpu_custom_call.1} parent=1 // pred_region
      %s348 = ssub.s32 256, 256
      %349 = vsyncadd [#allocation6], %s348
      %s350 = sshll.u32 [#allocation7], 4
      %s351 = int_to_ptr.vmem [resolvable:$true] %s350
      %356 = dma.vmem_to_hbm [thread:$0]  %s351, 256, %s5, [#allocation6], 128, 128, 8
    $region37: #{tpu_custom_call.1} parent=1 // pred_fallthru
      _
    // Predicated region
    $region38: #{tpu_custom_call.1} parent=1 // pred_check
      _
    $region39: #{tpu_custom_call.1} parent=1 // pred_check_branch
      %358 = sbr.rel (0) target = $region41
    $region40: #{tpu_custom_call.1} parent=1 // pred_region
      %359 = dma.done [#allocation6], 256
    $region41: #{tpu_custom_call.1} parent=1 // pred_fallthru
      _
    %360 = vsyncpa [#allocation5], 1
    %361 = vsyncpa [#allocation6], 1

</llo_original>
